<compile_context>
chip_gen: v7x
topology: tpu7x:2x2x1
jax: 0.10.0
libtpu: 0.0.40
codegen_flags: <defaults>
</compile_context>

<pallas_src>
import jax
import jax.numpy as jnp
from jax import lax
from jax.experimental import pallas as pl
from jax.experimental.pallas import tpu as pltpu

raw_text = ('We are about to study the idea of a computational process.\n'
            'Computational processes are abstract beings that inhabit computers.\n'
            'As they evolve, processes manipulate other abstract things called data.\n'
            'The evolution of a process is directed by a pattern of rules\n'
            'called a program. People create programs to direct processes. In effect,\n'
            'we conjure the spirits of the computer with our spells.').split()

vocab = set(raw_text)
vocab_size = len(vocab)


def _round_up(x, m):
    return ((x + m - 1) // m) * m


def cbow_fused_kernel(idx_ref, wc_ref, b1_ref, w2_ref, b2_ref, out_ref):
    # idx_ref: (TB, 2C) int32
    # wc_ref:  (2C*Vp, H) bf16   -- folded emb @ W1, stacked per context position
    # b1_ref:  (1, H)   f32
    # w2_ref:  (H, Vp)  bf16     -- vocab padded to 128 lanes (pad columns = 0)
    # b2_ref:  (1, Vp)  f32      -- pad lanes = -1e30 (inert under max / logsumexp)
    # out_ref: (TB, Vp) f32
    TB, Vp = out_ref.shape
    n_ctx = idx_ref.shape[1]
    K = wc_ref.shape[0]                       # = n_ctx * Vp

    idx = idx_ref[...]                        # (TB, 2C)
    col = lax.broadcasted_iota(jnp.int32, (TB, K), 1)

    # Wide one-hot (TB, 2C*Vp): segment c has a 1 at lane c*Vp + idx[:, c].
    # Built with plain VALU compares/adds (no concat/reshape relayouts); exact in bf16.
    wide = jnp.zeros((TB, K), jnp.float32)
    for c in range(n_ctx):                    # 2*C is tiny -> static unroll
        wide = wide + (col == (c * Vp + idx[:, c:c + 1])).astype(jnp.float32)
    wide = wide.astype(jnp.bfloat16)

    # Single K=2C*Vp, N=H matmul on the MXU (bf16 operands, f32 accumulation).
    h = jnp.dot(wide, wc_ref[...], preferred_element_type=jnp.float32)   # (TB, H)
    h = jnp.maximum(h + b1_ref[...], 0.0)                                # bias + ReLU (f32)

    logits = jnp.dot(h.astype(jnp.bfloat16), w2_ref[...],
                     preferred_element_type=jnp.float32) + b2_ref[...]   # (TB, Vp)

    # Numerically-stable log_softmax along the lane-dense (padded) vocab dim.
    # Keep the live-temporary count small: z replaces logits; exp(z) feeds the reduce directly.
    z = logits - jnp.max(logits, axis=-1, keepdims=True)
    out_ref[...] = z - jnp.log(jnp.sum(jnp.exp(z), axis=-1, keepdims=True))


def prepare_cbow_params(emb_table, w1, b1, w2, b2):
    """One-time prep: pad vocab to 128 lanes and fold the embedding table into W1.

    Returns a dict of device arrays + static sizes, reused across forward calls.
    """
    V, E = emb_table.shape
    feat, H = w1.shape
    n_ctx = feat // E
    assert feat == n_ctx * E
    Vp = _round_up(max(V, 128), 128)

    emb_p = jnp.zeros((Vp, E), jnp.float32).at[:V].set(emb_table)
    # Wc[c*Vp + v, :] = emb_p[v] @ W1[c*E:(c+1)*E, :]
    wc = jnp.concatenate(
        [emb_p @ w1[c * E:(c + 1) * E, :] for c in range(n_ctx)], axis=0)       # (n_ctx*Vp, H)
    wc = wc.astype(jnp.bfloat16)

    w2_p = jnp.zeros((H, Vp), jnp.float32).at[:, :V].set(w2).astype(jnp.bfloat16)
    b2_p = jnp.full((1, Vp), -1e30, jnp.float32).at[:, :V].set(b2)              # pad logits inert
    b1_p = jnp.asarray(b1, jnp.float32).reshape(1, H)

    return dict(wc=wc, b1=b1_p, w2=w2_p, b2=b2_p,
                n_ctx=n_ctx, V=V, Vp=Vp, H=H, E=E)


def cbow_forward(indices, params, *, batch_tile=256):
    """CBOW forward.

    indices: (2*C,) int32 (single example, matches the PyTorch module) -> (1, V)
             or (B, 2*C)  (batched)                                    -> (B, V)
    """
    single = indices.ndim == 1
    idx = indices[None, :] if single else indices
    idx = idx.astype(jnp.int32)

    B, n_ctx = idx.shape
    assert n_ctx == params["n_ctx"]
    V, Vp, H = params["V"], params["Vp"], params["H"]
    K = n_ctx * Vp

    # --- batch tiling: big tiles (>=256) to fill the MXU and amortize per-step overhead,
    #     but keep >= 2 grid steps when B is large so v7x's two TensorCores both get work.
    Bp8 = _round_up(B, 8)
    if Bp8 <= batch_tile:
        TB = Bp8
    else:
        TB = min(batch_tile, _round_up((Bp8 + 1) // 2, 8))
    Bp = _round_up(B, TB)
    grid_b = Bp // TB

    idx_p = jnp.zeros((Bp, n_ctx), jnp.int32).at[:B].set(idx)

    flops = 2 * Bp * (K * H + H * Vp)
    transcendentals = Bp * Vp + Bp
    bytes_accessed = (idx_p.size * 4 + params["wc"].size * 2 + H * 4
                      + params["w2"].size * 2 + Vp * 4 + Bp * Vp * 4)
    cost = pl.CostEstimate(flops=flops, transcendentals=transcendentals,
                           bytes_accessed=bytes_accessed)

    rep = lambda i: (0, 0)   # weights: same block every step (stay VMEM-resident)

    out = pl.pallas_call(
        cbow_fused_kernel,
        out_shape=jax.ShapeDtypeStruct((Bp, Vp), jnp.float32),
        grid=(grid_b,),
        in_specs=[
            pl.BlockSpec((TB, n_ctx), lambda i: (i, 0)),   # per-tile context indices
            pl.BlockSpec((K, H), rep),                     # folded emb@W1 (bf16)
            pl.BlockSpec((1, H), rep),                     # b1 (f32)
            pl.BlockSpec((H, Vp), rep),                    # w2 (bf16, vocab lane-padded)
            pl.BlockSpec((1, Vp), rep),                    # b2 (f32, pad = -1e30)
        ],
        out_specs=pl.BlockSpec((TB, Vp), lambda i: (i, 0)),
        compiler_params=pltpu.CompilerParams(
            dimension_semantics=("parallel",)),            # batch tiles independent (megacore)
        cost_estimate=cost,
    )(idx_p, params["wc"], params["b1"], params["w2"], params["b2"])

    return out[:B, :V]


if __name__ == "__main__":
    context_size = 2
    embedding_dim = 10
    hidden_dim = 128

    key = jax.random.PRNGKey(0)
    k_emb, k_w1, k_b1, k_w2, k_b2, k_idx1, k_idx2 = jax.random.split(key, 7)

    # Deterministic parameter init (shapes per the module's __init__).
    emb_table = jax.random.normal(k_emb, (vocab_size, embedding_dim), jnp.float32)
    w1 = jax.random.normal(k_w1, (2 * context_size * embedding_dim, hidden_dim), jnp.float32) * 0.1
    b1 = jax.random.normal(k_b1, (1, hidden_dim), jnp.float32) * 0.1
    w2 = jax.random.normal(k_w2, (hidden_dim, vocab_size), jnp.float32) * 0.1
    b2 = jax.random.normal(k_b2, (1, vocab_size), jnp.float32) * 0.1

    # One-time padding / embedding-fold (hoisted out of the per-call path).
    params = prepare_cbow_params(emb_table, w1, b1, w2, b2)

    def ref_forward(idx2d):
        x = emb_table[idx2d].reshape(idx2d.shape[0], -1)
        h = jax.nn.relu(x @ w1 + b1)
        return jax.nn.log_softmax(h @ w2 + b2, axis=1)

    # --- single-example path (matches the original module's forward semantics) ---
    inputs = jax.random.randint(k_idx1, (2 * context_size,), 0, vocab_size, jnp.int32)
    log_prob = jax.block_until_ready(cbow_forward(inputs, params))
    assert log_prob.shape == (1, vocab_size)
    assert jnp.allclose(log_prob, ref_forward(inputs[None, :]), atol=5e-2, rtol=5e-2), \
        "single-example mismatch"

    # --- batched path: large enough to exercise >= 2 grid steps with the default 256 tile ---
    batch = 300
    idx_batch = jax.random.randint(k_idx2, (batch, 2 * context_size), 0, vocab_size, jnp.int32)
    log_prob_b = jax.block_until_ready(cbow_forward(idx_batch, params))
    assert log_prob_b.shape == (batch, vocab_size)
    assert jnp.allclose(log_prob_b, ref_forward(idx_batch), atol=5e-2, rtol=5e-2), \
        "batched mismatch"

    # TODO(synk): the torch forward's debug print() calls of intermediate tensors are omitted.
    print("KERNEL_OK")
</pallas_src>

<mosaic_0001>
module attributes {stable_mosaic.version = 11 : i64} {
  func.func @cbow_fused_kernel(%arg0: i32, %arg1: memref<8x4xi32, #tpu.memory_space<vmem>>, %arg2: memref<512x128xbf16, #tpu.memory_space<vmem>>, %arg3: memref<1x128xf32, #tpu.memory_space<vmem>>, %arg4: memref<128x128xbf16, #tpu.memory_space<vmem>>, %arg5: memref<1x128xf32, #tpu.memory_space<vmem>>, %arg6: memref<8x128xf32, #tpu.memory_space<vmem>>) attributes {dimension_semantics = [#tpu.dimension_semantics<parallel>], iteration_bounds = array<i64: 1>, scalar_prefetch = 0 : i64, scratch_operands = 0 : i64, tpu.core_type = #tpu.core_type<tc>, window_params = [{transform_indices = @transform_0, window_bounds = array<i64: 8, 4>}, {pipeline_mode = #tpu.pipeline_mode<synchronous>, transform_indices = @transform_1, window_bounds = array<i64: 512, 128>}, {pipeline_mode = #tpu.pipeline_mode<synchronous>, transform_indices = @transform_2, window_bounds = array<i64: 1, 128>}, {pipeline_mode = #tpu.pipeline_mode<synchronous>, transform_indices = @transform_3, window_bounds = array<i64: 128, 128>}, {pipeline_mode = #tpu.pipeline_mode<synchronous>, transform_indices = @transform_4, window_bounds = array<i64: 1, 128>}, {transform_indices = @transform_5, window_bounds = array<i64: 8, 128>}]} {
    %c0 = arith.constant 0 : index
    %c0_0 = arith.constant 0 : index
    %0 = vector.load %arg1[%c0, %c0_0] : memref<8x4xi32, #tpu.memory_space<vmem>>, vector<8x4xi32>
    %1 = tpu.iota {dimensions = array<i32: 1>} : vector<8x512xi32>
    %cst = arith.constant 0.000000e+00 : f32
    %2 = vector.broadcast %cst : f32 to vector<8x512xf32>
    %3 = vector.extract_strided_slice %0 {offsets = [0, 0], sizes = [8, 1], strides = [1, 1]} : vector<8x4xi32> to vector<8x1xi32>
    %c0_i32 = arith.constant 0 : i32
    %4 = vector.broadcast %c0_i32 : i32 to vector<8x1xi32>
    %5 = arith.addi %4, %3 : vector<8x1xi32>
    %6 = vector.broadcast %5 : vector<8x1xi32> to vector<8x512xi32>
    %7 = arith.cmpi eq, %1, %6 : vector<8x512xi32>
    %8 = arith.extui %7 : vector<8x512xi1> to vector<8x512xi32>
    %9 = arith.sitofp %8 : vector<8x512xi32> to vector<8x512xf32>
    %10 = arith.addf %2, %9 : vector<8x512xf32>
    %11 = vector.extract_strided_slice %0 {offsets = [0, 1], sizes = [8, 1], strides = [1, 1]} : vector<8x4xi32> to vector<8x1xi32>
    %c128_i32 = arith.constant 128 : i32
    %12 = vector.broadcast %c128_i32 : i32 to vector<8x1xi32>
    %13 = arith.addi %12, %11 : vector<8x1xi32>
    %14 = vector.broadcast %13 : vector<8x1xi32> to vector<8x512xi32>
    %15 = arith.cmpi eq, %1, %14 : vector<8x512xi32>
    %16 = arith.extui %15 : vector<8x512xi1> to vector<8x512xi32>
    %17 = arith.sitofp %16 : vector<8x512xi32> to vector<8x512xf32>
    %18 = arith.addf %10, %17 : vector<8x512xf32>
    %19 = vector.extract_strided_slice %0 {offsets = [0, 2], sizes = [8, 1], strides = [1, 1]} : vector<8x4xi32> to vector<8x1xi32>
    %c256_i32 = arith.constant 256 : i32
    %20 = vector.broadcast %c256_i32 : i32 to vector<8x1xi32>
    %21 = arith.addi %20, %19 : vector<8x1xi32>
    %22 = vector.broadcast %21 : vector<8x1xi32> to vector<8x512xi32>
    %23 = arith.cmpi eq, %1, %22 : vector<8x512xi32>
    %24 = arith.extui %23 : vector<8x512xi1> to vector<8x512xi32>
    %25 = arith.sitofp %24 : vector<8x512xi32> to vector<8x512xf32>
    %26 = arith.addf %18, %25 : vector<8x512xf32>
    %27 = vector.extract_strided_slice %0 {offsets = [0, 3], sizes = [8, 1], strides = [1, 1]} : vector<8x4xi32> to vector<8x1xi32>
    %c384_i32 = arith.constant 384 : i32
    %28 = vector.broadcast %c384_i32 : i32 to vector<8x1xi32>
    %29 = arith.addi %28, %27 : vector<8x1xi32>
    %30 = vector.broadcast %29 : vector<8x1xi32> to vector<8x512xi32>
    %31 = arith.cmpi eq, %1, %30 : vector<8x512xi32>
    %32 = arith.extui %31 : vector<8x512xi1> to vector<8x512xi32>
    %33 = arith.sitofp %32 : vector<8x512xi32> to vector<8x512xf32>
    %34 = arith.addf %26, %33 : vector<8x512xf32>
    %35 = arith.truncf %34 : vector<8x512xf32> to vector<8x512xbf16>
    %c0_1 = arith.constant 0 : index
    %c0_2 = arith.constant 0 : index
    %36 = vector.load %arg2[%c0_1, %c0_2] : memref<512x128xbf16, #tpu.memory_space<vmem>>, vector<512x128xbf16>
    %cst_3 = arith.constant dense<0.000000e+00> : vector<8x128xf32>
    %37 = tpu.matmul %35, %36, %cst_3 {dimension_numbers = #tpu.dot_dimension_numbers<[1], [0], [0], [1], [0, 0, 1, 1], [], []>} : vector<8x512xbf16>, vector<512x128xbf16>, vector<8x128xf32> -> vector<8x128xf32>
    %c0_4 = arith.constant 0 : index
    %c0_5 = arith.constant 0 : index
    %38 = vector.load %arg3[%c0_4, %c0_5] : memref<1x128xf32, #tpu.memory_space<vmem>>, vector<1x128xf32>
    %39 = vector.broadcast %38 : vector<1x128xf32> to vector<8x128xf32>
    %40 = arith.addf %37, %39 : vector<8x128xf32>
    %cst_6 = arith.constant 0.000000e+00 : f32
    %41 = vector.broadcast %cst_6 : f32 to vector<8x128xf32>
    %42 = arith.maximumf %40, %41 : vector<8x128xf32>
    %43 = arith.truncf %42 : vector<8x128xf32> to vector<8x128xbf16>
    %c0_7 = arith.constant 0 : index
    %c0_8 = arith.constant 0 : index
    %44 = vector.load %arg4[%c0_7, %c0_8] : memref<128x128xbf16, #tpu.memory_space<vmem>>, vector<128x128xbf16>
    %cst_9 = arith.constant dense<0.000000e+00> : vector<8x128xf32>
    %45 = tpu.matmul %43, %44, %cst_9 {dimension_numbers = #tpu.dot_dimension_numbers<[1], [0], [0], [1], [0, 0, 1, 1], [], []>} : vector<8x128xbf16>, vector<128x128xbf16>, vector<8x128xf32> -> vector<8x128xf32>
    %c0_10 = arith.constant 0 : index
    %c0_11 = arith.constant 0 : index
    %46 = vector.load %arg5[%c0_10, %c0_11] : memref<1x128xf32, #tpu.memory_space<vmem>>, vector<1x128xf32>
    %47 = vector.broadcast %46 : vector<1x128xf32> to vector<8x128xf32>
    %48 = arith.addf %45, %47 : vector<8x128xf32>
    %cst_12 = arith.constant dense<0xFF800000> : vector<8xf32>
    %49 = vector.multi_reduction <maximumf>, %48, %cst_12 [1] : vector<8x128xf32> to vector<8xf32>
    %50 = vector.shape_cast %49 : vector<8xf32> to vector<8x1xf32>
    %51 = vector.broadcast %50 : vector<8x1xf32> to vector<8x128xf32>
    %52 = arith.subf %48, %51 : vector<8x128xf32>
    %53 = math.exp %52 : vector<8x128xf32>
    %cst_13 = arith.constant dense<0.000000e+00> : vector<8xf32>
    %54 = vector.multi_reduction <add>, %53, %cst_13 [1] : vector<8x128xf32> to vector<8xf32>
    %55 = vector.shape_cast %54 : vector<8xf32> to vector<8x1xf32>
    %56 = math.log %55 : vector<8x1xf32>
    %57 = vector.broadcast %56 : vector<8x1xf32> to vector<8x128xf32>
    %58 = arith.subf %52, %57 : vector<8x128xf32>
    %c0_14 = arith.constant 0 : index
    %c0_15 = arith.constant 0 : index
    %59 = vector.load %arg6[%c0_14, %c0_15] : memref<8x128xf32, #tpu.memory_space<vmem>>, vector<8x128xf32>
    tpu.vector_store %arg6[%c0_14, %c0_15], %58 {strides = array<i32>} : memref<8x128xf32, #tpu.memory_space<vmem>>, vector<8x128xf32>,
    return
  }
  func.func @transform_0(%arg0: i32) -> (i32, i32) {
    %c0_i32 = arith.constant 0 : i32
    %c0_i32_0 = arith.constant 0 : i32
    return %arg0, %c0_i32 : i32, i32
  }
  func.func @transform_1(%arg0: i32) -> (i32, i32) {
    %c0_i32 = arith.constant 0 : i32
    %c0_i32_0 = arith.constant 0 : i32
    %c0_i32_1 = arith.constant 0 : i32
    return %c0_i32, %c0_i32_0 : i32, i32
  }
  func.func @transform_2(%arg0: i32) -> (i32, i32) {
    %c0_i32 = arith.constant 0 : i32
    %c0_i32_0 = arith.constant 0 : i32
    %c0_i32_1 = arith.constant 0 : i32
    return %c0_i32, %c0_i32_0 : i32, i32
  }
  func.func @transform_3(%arg0: i32) -> (i32, i32) {
    %c0_i32 = arith.constant 0 : i32
    %c0_i32_0 = arith.constant 0 : i32
    %c0_i32_1 = arith.constant 0 : i32
    return %c0_i32, %c0_i32_0 : i32, i32
  }
  func.func @transform_4(%arg0: i32) -> (i32, i32) {
    %c0_i32 = arith.constant 0 : i32
    %c0_i32_0 = arith.constant 0 : i32
    %c0_i32_1 = arith.constant 0 : i32
    return %c0_i32, %c0_i32_0 : i32, i32
  }
  func.func @transform_5(%arg0: i32) -> (i32, i32) {
    %c0_i32 = arith.constant 0 : i32
    %c0_i32_0 = arith.constant 0 : i32
    return %arg0, %c0_i32 : i32, i32
  }
}

</mosaic_0001>

<llo_original>
// kernel: tpu_custom_call.1
$region0: #{tpu_custom_call.1}
  #allocation0 [shape = 'u32[]', space=smem, size = 0x4, offset = 0x4, fixed_abs, tag = 'smem constant byte address 0x4 - core index']
  #allocation1 [shape = 'u32[144,128]{1,0:T(1,128)}', space=vmem, size = 0x12000, scoped, tag = 'internal scratch']
  %s0 = inlined_call_operand.vmem [shape: s32[8,4], index: 0, kind: input, shape index: {}]
  %s1 = inlined_call_operand.hbm [shape: bf16[512,128], index: 1, kind: input, shape index: {}]
  %s2 = inlined_call_operand.vmem [shape: f32[1,128], index: 2, kind: input, shape index: {}]
  %s3 = inlined_call_operand.hbm [shape: bf16[128,128], index: 3, kind: input, shape index: {}]
  %s4 = inlined_call_operand.vmem [shape: f32[1,128], index: 4, kind: input, shape index: {}]
  %s5 = inlined_call_operand.hbm [shape: f32[8,128], index: 5, kind: output, shape index: {}]
  %s6 = sld [smem:[#allocation0]]
  $region38: #{tpu_custom_call.1} parent=0
    _
  %s8 = ssub.s32 1, %s6
  %s9 = scalar_select 0, %s8, %s6
  $region1: #{tpu_custom_call.1} parent=0
    #allocation2 [shape = 'u8[131072]{0}', space=vmem, size = 0x20000, scoped, tag = 'input window, operand 1, single buffered']
    #allocation3 [shape = 's32[1]{0}', space=sflag, size = 0x4, scoped, tag = 'scoped memory for tpu_custom_call.1']
    #allocation4 [shape = 's32[1]{0}', space=sflag, size = 0x4, scoped, tag = 'scoped memory for tpu_custom_call.1']
    #allocation5 [shape = 'u8[32768]{0}', space=vmem, size = 0x8000, scoped, tag = 'input window, operand 3, single buffered']
    #allocation6 [shape = 's32[1]{0}', space=sflag, size = 0x4, scoped, tag = 'scoped memory for tpu_custom_call.1']
    #allocation7 [shape = 'u8[4096]{0}', space=vmem, size = 0x1000, scoped, tag = 'output window, operand 0, single buffered']
    %10 = vsyncpa [#allocation3], 0
    %11 = vsyncpa [#allocation6], 0
    %12 = vsyncpa [#allocation4], 0
    // Predicated region
    $region2: #{tpu_custom_call.1} parent=1 // pred_check
      _
    $region3: #{tpu_custom_call.1} parent=1 // pred_check_branch
      %14 = sbr.rel (0) target = $region5
    $region4: #{tpu_custom_call.1} parent=1 // pred_region
      _
    $region5: #{tpu_custom_call.1} parent=1 // pred_fallthru
      _
    // Predicated region
    $region6: #{tpu_custom_call.1} parent=1 // pred_check
      _
    $region7: #{tpu_custom_call.1} parent=1 // pred_check_branch
      %16 = sbr.rel (0) target = $region9
    $region8: #{tpu_custom_call.1} parent=1 // pred_region
      %s18 = ssub.s32 4096, 4096
      %19 = vsyncadd [#allocation3], %s18
      %s20 = sshll.u32 [#allocation2], 4
      %s21 = int_to_ptr.vmem [resolvable:$true] %s20
      %26 = dma.hbm_to_vmem [thread:$0]  %s1, 4096, %s21, [#allocation3], 64, 64, 4
    $region9: #{tpu_custom_call.1} parent=1 // pred_fallthru
      _
    // Predicated region
    $region10: #{tpu_custom_call.1} parent=1 // pred_check
      _
    $region11: #{tpu_custom_call.1} parent=1 // pred_check_branch
      %28 = sbr.rel (0) target = $region13
    $region12: #{tpu_custom_call.1} parent=1 // pred_region
      _
    $region13: #{tpu_custom_call.1} parent=1 // pred_fallthru
      _
    // Predicated region
    $region14: #{tpu_custom_call.1} parent=1 // pred_check
      _
    $region15: #{tpu_custom_call.1} parent=1 // pred_check_branch
      %30 = sbr.rel (0) target = $region17
    $region16: #{tpu_custom_call.1} parent=1 // pred_region
      %s32 = ssub.s32 1024, 1024
      %33 = vsyncadd [#allocation6], %s32
      %s34 = sshll.u32 [#allocation5], 4
      %s35 = int_to_ptr.vmem [resolvable:$true] %s34
      %40 = dma.hbm_to_vmem [thread:$0]  %s3, 1024, %s35, [#allocation6], 64, 64, 4
    $region17: #{tpu_custom_call.1} parent=1 // pred_fallthru
      _
    // Predicated region
    $region18: #{tpu_custom_call.1} parent=1 // pred_check
      _
    $region19: #{tpu_custom_call.1} parent=1 // pred_check_branch
      %42 = sbr.rel (0) target = $region21
    $region20: #{tpu_custom_call.1} parent=1 // pred_region
      _
    $region21: #{tpu_custom_call.1} parent=1 // pred_fallthru
      _
    // Predicated region
    $region22: #{tpu_custom_call.1} parent=1 // pred_check
      _
    $region23: #{tpu_custom_call.1} parent=1 // pred_check_branch
      %44 = sbr.rel (0) target = $region25
    $region24: #{tpu_custom_call.1} parent=1 // pred_region
      %45 = dma.done [#allocation3], 4096
    $region25: #{tpu_custom_call.1} parent=1 // pred_fallthru
      _
    // Predicated region
    $region26: #{tpu_custom_call.1} parent=1 // pred_check
      _
    $region27: #{tpu_custom_call.1} parent=1 // pred_check_branch
      %47 = sbr.rel (0) target = $region29
    $region28: #{tpu_custom_call.1} parent=1 // pred_region
      %48 = dma.done [#allocation6], 1024
    $region29: #{tpu_custom_call.1} parent=1 // pred_fallthru
      _
    %v50 = vld [vmem:[%s0] sm:$0xff]
    %v51 = vlaneseq
    %v52 = vand.u32 %v51, 127
    %v53 = vadd.s32 %v52, 128
    %v54 = vadd.s32 %v52, 256
    %v55 = vadd.s32 %v52, 384
    %56 = vset.pattern.permute.xlu0 0
    %57 = vperm.xlu0 %56, %v50
    %v58 = vpop.permute.xlu0 %57
    %vm59 = vcmp.eq.s32.totalorder %v52, %v58
    %vm60 = vcmp.eq.s32.totalorder %v53, %v58
    %vm61 = vcmp.eq.s32.totalorder %v54, %v58
    %vm62 = vcmp.eq.s32.totalorder %v55, %v58
    %v63 = vsel %vm59, 1, 0
    %v64 = vsel %vm60, 1, 0
    %v65 = vsel %vm61, 1, 0
    %v66 = vsel %vm62, 1, 0
    %v67 = vcvt.s32.f32 %v63
    %v68 = vcvt.s32.f32 %v64
    %v69 = vcvt.s32.f32 %v65
    %v70 = vcvt.s32.f32 %v66
    %v71 = vadd.f32 %v67, 0.0
    %v72 = vadd.f32 %v68, 0.0
    %v73 = vadd.f32 %v69, 0.0
    %v74 = vadd.f32 %v70, 0.0
    %v75 = vadd.s32 %v50, 128
    %76 = vset.pattern.permute.xlu0 1
    %77 = vperm.xlu0 %76, %v75
    %v78 = vpop.permute.xlu0 %77
    %vm79 = vcmp.eq.s32.totalorder %v52, %v78
    %vm80 = vcmp.eq.s32.totalorder %v53, %v78
    %vm81 = vcmp.eq.s32.totalorder %v54, %v78
    %vm82 = vcmp.eq.s32.totalorder %v55, %v78
    %v83 = vsel %vm79, 1, 0
    %v84 = vsel %vm80, 1, 0
    %v85 = vsel %vm81, 1, 0
    %v86 = vsel %vm82, 1, 0
    %v87 = vcvt.s32.f32 %v83
    %v88 = vcvt.s32.f32 %v84
    %v89 = vcvt.s32.f32 %v85
    %v90 = vcvt.s32.f32 %v86
    %v91 = vadd.f32 %v71, %v87
    %v92 = vadd.f32 %v72, %v88
    %v93 = vadd.f32 %v73, %v89
    %v94 = vadd.f32 %v74, %v90
    %v95 = vadd.s32 %v50, 256
    %96 = vset.pattern.permute.xlu0 2
    %97 = vperm.xlu0 %96, %v95
    %v98 = vpop.permute.xlu0 %97
    %vm99 = vcmp.eq.s32.totalorder %v52, %v98
    %vm100 = vcmp.eq.s32.totalorder %v53, %v98
    %vm101 = vcmp.eq.s32.totalorder %v54, %v98
    %vm102 = vcmp.eq.s32.totalorder %v55, %v98
    %v103 = vsel %vm99, 1, 0
    %v104 = vsel %vm100, 1, 0
    %v105 = vsel %vm101, 1, 0
    %v106 = vsel %vm102, 1, 0
    %v107 = vcvt.s32.f32 %v103
    %v108 = vcvt.s32.f32 %v104
    %v109 = vcvt.s32.f32 %v105
    %v110 = vcvt.s32.f32 %v106
    %v111 = vadd.f32 %v91, %v107
    %v112 = vadd.f32 %v92, %v108
    %v113 = vadd.f32 %v93, %v109
    %v114 = vadd.f32 %v94, %v110
    %v115 = vadd.s32 %v50, 384
    %116 = vset.pattern.permute.xlu0 3
    %117 = vperm.xlu0 %116, %v115
    %v118 = vpop.permute.xlu0 %117
    %vm119 = vcmp.eq.s32.totalorder %v52, %v118
    %vm120 = vcmp.eq.s32.totalorder %v53, %v118
    %vm121 = vcmp.eq.s32.totalorder %v54, %v118
    %vm122 = vcmp.eq.s32.totalorder %v55, %v118
    %v123 = vsel %vm119, 1, 0
    %v124 = vsel %vm120, 1, 0
    %v125 = vsel %vm121, 1, 0
    %v126 = vsel %vm122, 1, 0
    %v127 = vcvt.s32.f32 %v123
    %v128 = vcvt.s32.f32 %v124
    %v129 = vcvt.s32.f32 %v125
    %v130 = vcvt.s32.f32 %v126
    %v131 = vadd.f32 %v111, %v127
    %v132 = vadd.f32 %v112, %v128
    %v133 = vadd.f32 %v113, %v129
    %v134 = vadd.f32 %v114, %v130
    %v135 = vpack.c.bf16 %v131, %v131
    %v136 = vpack.c.bf16 %v132, %v132
    %v137 = vpack.c.bf16 %v133, %v133
    %v138 = vpack.c.bf16 %v134, %v134
    %v139 = vld [vmem:[#allocation2] sm:$0xf]
    %v140 = vld [vmem:[#allocation2 + $0x4] sm:$0xf]
    %v141 = vld [vmem:[#allocation2 + $0x8] sm:$0xf]
    %v142 = vld [vmem:[#allocation2 + $0xc] sm:$0xf]
    %v143 = vld [vmem:[#allocation2 + $0x10] sm:$0xf]
    %v144 = vld [vmem:[#allocation2 + $0x14] sm:$0xf]
    %v145 = vld [vmem:[#allocation2 + $0x18] sm:$0xf]
    %v146 = vld [vmem:[#allocation2 + $0x1c] sm:$0xf]
    %v147 = vld [vmem:[#allocation2 + $0x20] sm:$0xf]
    %v148 = vld [vmem:[#allocation2 + $0x24] sm:$0xf]
    %v149 = vld [vmem:[#allocation2 + $0x28] sm:$0xf]
    %v150 = vld [vmem:[#allocation2 + $0x2c] sm:$0xf]
    %v151 = vld [vmem:[#allocation2 + $0x30] sm:$0xf]
    %v152 = vld [vmem:[#allocation2 + $0x34] sm:$0xf]
    %v153 = vld [vmem:[#allocation2 + $0x38] sm:$0xf]
    %v154 = vld [vmem:[#allocation2 + $0x3c] sm:$0xf]
    %v155 = vld [vmem:[#allocation2 + $0x40] sm:$0xf]
    %v156 = vld [vmem:[#allocation2 + $0x44] sm:$0xf]
    %v157 = vld [vmem:[#allocation2 + $0x48] sm:$0xf]
    %v158 = vld [vmem:[#allocation2 + $0x4c] sm:$0xf]
    %v159 = vld [vmem:[#allocation2 + $0x50] sm:$0xf]
    %v160 = vld [vmem:[#allocation2 + $0x54] sm:$0xf]
    %v161 = vld [vmem:[#allocation2 + $0x58] sm:$0xf]
    %v162 = vld [vmem:[#allocation2 + $0x5c] sm:$0xf]
    %v163 = vld [vmem:[#allocation2 + $0x60] sm:$0xf]
    %v164 = vld [vmem:[#allocation2 + $0x64] sm:$0xf]
    %v165 = vld [vmem:[#allocation2 + $0x68] sm:$0xf]
    %v166 = vld [vmem:[#allocation2 + $0x6c] sm:$0xf]
    %v167 = vld [vmem:[#allocation2 + $0x70] sm:$0xf]
    %v168 = vld [vmem:[#allocation2 + $0x74] sm:$0xf]
    %v169 = vld [vmem:[#allocation2 + $0x78] sm:$0xf]
    %v170 = vld [vmem:[#allocation2 + $0x7c] sm:$0xf]
    %v171 = vld [vmem:[#allocation2 + $0x80] sm:$0xf]
    %v172 = vld [vmem:[#allocation2 + $0x84] sm:$0xf]
    %v173 = vld [vmem:[#allocation2 + $0x88] sm:$0xf]
    %v174 = vld [vmem:[#allocation2 + $0x8c] sm:$0xf]
    %v175 = vld [vmem:[#allocation2 + $0x90] sm:$0xf]
    %v176 = vld [vmem:[#allocation2 + $0x94] sm:$0xf]
    %v177 = vld [vmem:[#allocation2 + $0x98] sm:$0xf]
    %v178 = vld [vmem:[#allocation2 + $0x9c] sm:$0xf]
    %v179 = vld [vmem:[#allocation2 + $0xa0] sm:$0xf]
    %v180 = vld [vmem:[#allocation2 + $0xa4] sm:$0xf]
    %v181 = vld [vmem:[#allocation2 + $0xa8] sm:$0xf]
    %v182 = vld [vmem:[#allocation2 + $0xac] sm:$0xf]
    %v183 = vld [vmem:[#allocation2 + $0xb0] sm:$0xf]
    %v184 = vld [vmem:[#allocation2 + $0xb4] sm:$0xf]
    %v185 = vld [vmem:[#allocation2 + $0xb8] sm:$0xf]
    %v186 = vld [vmem:[#allocation2 + $0xbc] sm:$0xf]
    %v187 = vld [vmem:[#allocation2 + $0xc0] sm:$0xf]
    %v188 = vld [vmem:[#allocation2 + $0xc4] sm:$0xf]
    %v189 = vld [vmem:[#allocation2 + $0xc8] sm:$0xf]
    %v190 = vld [vmem:[#allocation2 + $0xcc] sm:$0xf]
    %v191 = vld [vmem:[#allocation2 + $0xd0] sm:$0xf]
    %v192 = vld [vmem:[#allocation2 + $0xd4] sm:$0xf]
    %v193 = vld [vmem:[#allocation2 + $0xd8] sm:$0xf]
    %v194 = vld [vmem:[#allocation2 + $0xdc] sm:$0xf]
    %v195 = vld [vmem:[#allocation2 + $0xe0] sm:$0xf]
    %v196 = vld [vmem:[#allocation2 + $0xe4] sm:$0xf]
    %v197 = vld [vmem:[#allocation2 + $0xe8] sm:$0xf]
    %v198 = vld [vmem:[#allocation2 + $0xec] sm:$0xf]
    %v199 = vld [vmem:[#allocation2 + $0xf0] sm:$0xf]
    %v200 = vld [vmem:[#allocation2 + $0xf4] sm:$0xf]
    %v201 = vld [vmem:[#allocation2 + $0xf8] sm:$0xf]
    %v202 = vld [vmem:[#allocation2 + $0xfc] sm:$0xf]
    %v203 = vld [vmem:[%s2] sm:$0x1]
    %v205 = vlaneseq
    %v206 = vshrl.u32 %v205, 7
    %v207 = vsub.s32 0, %v206
    %v208 = vrot.slane %v203, %v207
    %v274 = vunpack.c.l.b16 %v139
    %v275 = vunpack.c.l.b16 %v140
    %v276 = vunpack.c.l.b16 %v141
    %v277 = vunpack.c.l.b16 %v142
    %v278 = vunpack.c.l.b16 %v143
    %v279 = vunpack.c.l.b16 %v144
    %v280 = vunpack.c.l.b16 %v145
    %v281 = vunpack.c.l.b16 %v146
    %v282 = vunpack.c.l.b16 %v147
    %v283 = vunpack.c.l.b16 %v148
    %v284 = vunpack.c.l.b16 %v149
    %v285 = vunpack.c.l.b16 %v150
    %v286 = vunpack.c.l.b16 %v151
    %v287 = vunpack.c.l.b16 %v152
    %v288 = vunpack.c.l.b16 %v153
    %v289 = vunpack.c.l.b16 %v154
    %v290 = vunpack.c.l.b16 %v155
    %v291 = vunpack.c.l.b16 %v156
    %v292 = vunpack.c.l.b16 %v157
    %v293 = vunpack.c.l.b16 %v158
    %v294 = vunpack.c.l.b16 %v159
    %v295 = vunpack.c.l.b16 %v160
    %v296 = vunpack.c.l.b16 %v161
    %v297 = vunpack.c.l.b16 %v162
    %v298 = vunpack.c.l.b16 %v163
    %v299 = vunpack.c.l.b16 %v164
    %v300 = vunpack.c.l.b16 %v165
    %v301 = vunpack.c.l.b16 %v166
    %v302 = vunpack.c.l.b16 %v167
    %v303 = vunpack.c.l.b16 %v168
    %v304 = vunpack.c.l.b16 %v169
    %v305 = vunpack.c.l.b16 %v170
    %v306 = vunpack.c.l.b16 %v171
    %v307 = vunpack.c.l.b16 %v172
    %v308 = vunpack.c.l.b16 %v173
    %v309 = vunpack.c.l.b16 %v174
    %v310 = vunpack.c.l.b16 %v175
    %v311 = vunpack.c.l.b16 %v176
    %v312 = vunpack.c.l.b16 %v177
    %v313 = vunpack.c.l.b16 %v178
    %v314 = vunpack.c.l.b16 %v179
    %v315 = vunpack.c.l.b16 %v180
    %v316 = vunpack.c.l.b16 %v181
    %v317 = vunpack.c.l.b16 %v182
    %v318 = vunpack.c.l.b16 %v183
    %v319 = vunpack.c.l.b16 %v184
    %v320 = vunpack.c.l.b16 %v185
    %v321 = vunpack.c.l.b16 %v186
    %v322 = vunpack.c.l.b16 %v187
    %v323 = vunpack.c.l.b16 %v188
    %v324 = vunpack.c.l.b16 %v189
    %v325 = vunpack.c.l.b16 %v190
    %v326 = vunpack.c.l.b16 %v191
    %v327 = vunpack.c.l.b16 %v192
    %v328 = vunpack.c.l.b16 %v193
    %v329 = vunpack.c.l.b16 %v194
    %v330 = vunpack.c.l.b16 %v195
    %v331 = vunpack.c.l.b16 %v196
    %v332 = vunpack.c.l.b16 %v197
    %v333 = vunpack.c.l.b16 %v198
    %v334 = vunpack.c.l.b16 %v199
    %v335 = vunpack.c.l.b16 %v200
    %v336 = vunpack.c.l.b16 %v201
    %v337 = vunpack.c.l.b16 %v202
    %v338 = vpack.c.b16 %v275, %v274
    %v339 = vpack.c.b16 %v277, %v276
    %v340 = vpack.c.b16 %v279, %v278
    %v341 = vpack.c.b16 %v281, %v280
    %v342 = vpack.c.b16 %v283, %v282
    %v343 = vpack.c.b16 %v285, %v284
    %v344 = vpack.c.b16 %v287, %v286
    %v345 = vpack.c.b16 %v289, %v288
    %v346 = vpack.c.b16 %v291, %v290
    %v347 = vpack.c.b16 %v293, %v292
    %v348 = vpack.c.b16 %v295, %v294
    %v349 = vpack.c.b16 %v297, %v296
    %v350 = vpack.c.b16 %v299, %v298
    %v351 = vpack.c.b16 %v301, %v300
    %v352 = vpack.c.b16 %v303, %v302
    %v353 = vpack.c.b16 %v305, %v304
    %v354 = vpack.c.b16 %v307, %v306
    %v355 = vpack.c.b16 %v309, %v308
    %v356 = vpack.c.b16 %v311, %v310
    %v357 = vpack.c.b16 %v313, %v312
    %v358 = vpack.c.b16 %v315, %v314
    %v359 = vpack.c.b16 %v317, %v316
    %v360 = vpack.c.b16 %v319, %v318
    %v361 = vpack.c.b16 %v321, %v320
    %v362 = vpack.c.b16 %v323, %v322
    %v363 = vpack.c.b16 %v325, %v324
    %v364 = vpack.c.b16 %v327, %v326
    %v365 = vpack.c.b16 %v329, %v328
    %v366 = vpack.c.b16 %v331, %v330
    %v367 = vpack.c.b16 %v333, %v332
    %v368 = vpack.c.b16 %v335, %v334
    %v369 = vpack.c.b16 %v337, %v336
    %402 = vmatprep.subr.bf16.mxu0 0
    %403 = vmatpush1.bf16.msra.mxu0 %v338
    %404 = vmatprep.subr.bf16.mxu0 0
    %405 = vmatpush1.bf16.msra.mxu0 %v339
    %406 = vmatprep.subr.bf16.mxu0 0
    %407 = vmatpush1.bf16.msra.mxu0 %v340
    %408 = vmatprep.subr.bf16.mxu0 0
    %409 = vmatpush1.bf16.msra.mxu0 %v341
    %410 = vmatprep.subr.bf16.mxu0 0
    %411 = vmatpush1.bf16.msra.mxu0 %v342
    %412 = vmatprep.subr.bf16.mxu0 0
    %413 = vmatpush1.bf16.msra.mxu0 %v343
    %414 = vmatprep.subr.bf16.mxu0 0
    %415 = vmatpush1.bf16.msra.mxu0 %v344
    %416 = vmatprep.subr.bf16.mxu0 0
    %417 = vmatpush1.bf16.msra.mxu0 %v345
    %418 = vmatprep.subr.bf16.mxu0 0
    %419 = vmatpush1.bf16.msra.mxu0 %v346
    %420 = vmatprep.subr.bf16.mxu0 0
    %421 = vmatpush1.bf16.msra.mxu0 %v347
    %422 = vmatprep.subr.bf16.mxu0 0
    %423 = vmatpush1.bf16.msra.mxu0 %v348
    %424 = vmatprep.subr.bf16.mxu0 0
    %425 = vmatpush1.bf16.msra.mxu0 %v349
    %426 = vmatprep.subr.bf16.mxu0 0
    %427 = vmatpush1.bf16.msra.mxu0 %v350
    %428 = vmatprep.subr.bf16.mxu0 0
    %429 = vmatpush1.bf16.msra.mxu0 %v351
    %430 = vmatprep.subr.bf16.mxu0 0
    %431 = vmatpush1.bf16.msra.mxu0 %v352
    %432 = vmatprep.subr.bf16.mxu0 0
    %433 = vmatpush1.bf16.msra.mxu0 %v353
    %434 = vmatprep.mubr.bf16.mxu0 %v136
    %435 = vmatmul.mubr.bf16.gmra.mrb[0].mxu0 %v135
    %v436 = vpop.f32.mrb[0].mxu0
    %v437 = vadd.f32 %v208, %v436
    %v438 = vpop.f32.mrb[0].mxu0
    %v439 = vpop.f32.mrb[0].mxu0
    %v440 = vpop.f32.mrb[0].mxu0
    %441 = vdwg.mxu0
    %442 = vmatprep.subr.bf16.mxu0 0
    %443 = vmatpush1.bf16.msra.mxu0 %v354
    %444 = vmatprep.subr.bf16.mxu0 0
    %445 = vmatpush1.bf16.msra.mxu0 %v355
    %446 = vmatprep.subr.bf16.mxu0 0
    %447 = vmatpush1.bf16.msra.mxu0 %v356
    %448 = vmatprep.subr.bf16.mxu0 0
    %449 = vmatpush1.bf16.msra.mxu0 %v357
    %450 = vmatprep.subr.bf16.mxu0 0
    %451 = vmatpush1.bf16.msra.mxu0 %v358
    %452 = vmatprep.subr.bf16.mxu0 0
    %453 = vmatpush1.bf16.msra.mxu0 %v359
    %454 = vmatprep.subr.bf16.mxu0 0
    %455 = vmatpush1.bf16.msra.mxu0 %v360
    %456 = vmatprep.subr.bf16.mxu0 0
    %457 = vmatpush1.bf16.msra.mxu0 %v361
    %458 = vmatprep.subr.bf16.mxu0 0
    %459 = vmatpush1.bf16.msra.mxu0 %v362
    %460 = vmatprep.subr.bf16.mxu0 0
    %461 = vmatpush1.bf16.msra.mxu0 %v363
    %462 = vmatprep.subr.bf16.mxu0 0
    %463 = vmatpush1.bf16.msra.mxu0 %v364
    %464 = vmatprep.subr.bf16.mxu0 0
    %465 = vmatpush1.bf16.msra.mxu0 %v365
    %466 = vmatprep.subr.bf16.mxu0 0
    %467 = vmatpush1.bf16.msra.mxu0 %v366
    %468 = vmatprep.subr.bf16.mxu0 0
    %469 = vmatpush1.bf16.msra.mxu0 %v367
    %470 = vmatprep.subr.bf16.mxu0 0
    %471 = vmatpush1.bf16.msra.mxu0 %v368
    %472 = vmatprep.subr.bf16.mxu0 0
    %473 = vmatpush1.bf16.msra.mxu0 %v369
    %474 = vmatprep.mubr.bf16.mxu0 %v138
    %475 = vmatmul.mubr.bf16.gmra.mrb[0].mxu0 %v137
    %v476 = vpop.f32.mrb[0].mxu0
    %v477 = vadd.f32 %v437, %v476
    %v478 = vpop.f32.mrb[0].mxu0
    %v479 = vpop.f32.mrb[0].mxu0
    %v480 = vpop.f32.mrb[0].mxu0
    %481 = vdwg.mxu0
    %v482 = vmax.f32 %v477, 0.0
    %v483 = vpack.c.bf16 %v482, %v482
    %v484 = vld [vmem:[#allocation5] sm:$0xf]
    %v485 = vld [vmem:[#allocation5 + $0x4] sm:$0xf]
    %v486 = vld [vmem:[#allocation5 + $0x8] sm:$0xf]
    %v487 = vld [vmem:[#allocation5 + $0xc] sm:$0xf]
    %v488 = vld [vmem:[#allocation5 + $0x10] sm:$0xf]
    %v489 = vld [vmem:[#allocation5 + $0x14] sm:$0xf]
    %v490 = vld [vmem:[#allocation5 + $0x18] sm:$0xf]
    %v491 = vld [vmem:[#allocation5 + $0x1c] sm:$0xf]
    %v492 = vld [vmem:[#allocation5 + $0x20] sm:$0xf]
    %v493 = vld [vmem:[#allocation5 + $0x24] sm:$0xf]
    %v494 = vld [vmem:[#allocation5 + $0x28] sm:$0xf]
    %v495 = vld [vmem:[#allocation5 + $0x2c] sm:$0xf]
    %v496 = vld [vmem:[#allocation5 + $0x30] sm:$0xf]
    %v497 = vld [vmem:[#allocation5 + $0x34] sm:$0xf]
    %v498 = vld [vmem:[#allocation5 + $0x38] sm:$0xf]
    %v499 = vld [vmem:[#allocation5 + $0x3c] sm:$0xf]
    %v500 = vld [vmem:[%s4] sm:$0x1]
    %v502 = vlaneseq
    %v503 = vshrl.u32 %v502, 7
    %v504 = vsub.s32 0, %v503
    %v505 = vrot.slane %v500, %v504
    %v523 = vunpack.c.l.b16 %v484
    %v524 = vunpack.c.l.b16 %v485
    %v525 = vunpack.c.l.b16 %v486
    %v526 = vunpack.c.l.b16 %v487
    %v527 = vunpack.c.l.b16 %v488
    %v528 = vunpack.c.l.b16 %v489
    %v529 = vunpack.c.l.b16 %v490
    %v530 = vunpack.c.l.b16 %v491
    %v531 = vunpack.c.l.b16 %v492
    %v532 = vunpack.c.l.b16 %v493
    %v533 = vunpack.c.l.b16 %v494
    %v534 = vunpack.c.l.b16 %v495
    %v535 = vunpack.c.l.b16 %v496
    %v536 = vunpack.c.l.b16 %v497
    %v537 = vunpack.c.l.b16 %v498
    %v538 = vunpack.c.l.b16 %v499
    %v539 = vpack.c.b16 %v524, %v523
    %v540 = vpack.c.b16 %v526, %v525
    %v541 = vpack.c.b16 %v528, %v527
    %v542 = vpack.c.b16 %v530, %v529
    %v543 = vpack.c.b16 %v532, %v531
    %v544 = vpack.c.b16 %v534, %v533
    %v545 = vpack.c.b16 %v536, %v535
    %v546 = vpack.c.b16 %v538, %v537
    %555 = vmatprep.subr.bf16.mxu0 0
    %556 = vmatpush1.bf16.msra.mxu0 %v539
    %557 = vmatprep.subr.bf16.mxu0 0
    %558 = vmatpush1.bf16.msra.mxu0 %v540
    %559 = vmatprep.subr.bf16.mxu0 0
    %560 = vmatpush1.bf16.msra.mxu0 %v541
    %561 = vmatprep.subr.bf16.mxu0 0
    %562 = vmatpush1.bf16.msra.mxu0 %v542
    %563 = vmatprep.subr.bf16.mxu0 0
    %564 = vmatpush1.bf16.msra.mxu0 %v543
    %565 = vmatprep.subr.bf16.mxu0 0
    %566 = vmatpush1.bf16.msra.mxu0 %v544
    %567 = vmatprep.subr.bf16.mxu0 0
    %568 = vmatpush1.bf16.msra.mxu0 %v545
    %569 = vmatprep.subr.bf16.mxu0 0
    %570 = vmatpush1.bf16.msra.mxu0 %v546
    %571 = vmatprep.subr.bf16.mxu0 0
    %572 = vmatpush1.bf16.msra.mxu0 0
    %573 = vmatprep.subr.bf16.mxu0 0
    %574 = vmatpush1.bf16.msra.mxu0 0
    %575 = vmatprep.subr.bf16.mxu0 0
    %576 = vmatpush1.bf16.msra.mxu0 0
    %577 = vmatprep.subr.bf16.mxu0 0
    %578 = vmatpush1.bf16.msra.mxu0 0
    %579 = vmatprep.subr.bf16.mxu0 0
    %580 = vmatpush1.bf16.msra.mxu0 0
    %581 = vmatprep.subr.bf16.mxu0 0
    %582 = vmatpush1.bf16.msra.mxu0 0
    %583 = vmatprep.subr.bf16.mxu0 0
    %584 = vmatpush1.bf16.msra.mxu0 0
    %585 = vmatprep.subr.bf16.mxu0 0
    %586 = vmatpush1.bf16.msra.mxu0 0
    %587 = vmatprep.mubr.bf16.mxu0 0
    %588 = vmatmul.mubr.bf16.gmra.mrb[0].mxu0 %v483
    %v589 = vpop.f32.mrb[0].mxu0
    %v590 = vadd.f32 %v505, %v589
    %v591 = vpop.f32.mrb[0].mxu0
    %v592 = vpop.f32.mrb[0].mxu0
    %v593 = vpop.f32.mrb[0].mxu0
    %594 = vdwg.mxu0
    %595 = vmax.xlane.f32.xlu0 %v590
    %v596 = vpop.xlane.xlu0 %595
    %v597 = vsub.f32 %v590, %v596
    %v598 = vmul.f32 %v597, 1.442695
    %v599 = vpow.pop %v598
    %600 = vadd.xlane.f32.xlu0 %v599
    %v601 = vpop.xlane.xlu0 %600
    %v602 = vlog2.pop %v601
    %v603 = vmul.f32 %v602, 0.6931472
    %v604 = vsub.f32 %v597, %v603
    %605 = vst [vmem:[#allocation7] sm:$0xff] %v604
    // Predicated region
    $region30: #{tpu_custom_call.1} parent=1 // pred_check
      _
    $region31: #{tpu_custom_call.1} parent=1 // pred_check_branch
      %607 = sbr.rel (0) target = $region33
    $region32: #{tpu_custom_call.1} parent=1 // pred_region
      %s609 = ssub.s32 128, 128
      %610 = vsyncadd [#allocation4], %s609
      %s612 = sshll.u32 [#allocation7], 4
      %s613 = int_to_ptr.vmem [resolvable:$true] %s612
      %615 = dma.vmem_to_hbm [thread:$0]  %s613, 128, %s5, [#allocation4]
    $region33: #{tpu_custom_call.1} parent=1 // pred_fallthru
      _
    // Predicated region
    $region34: #{tpu_custom_call.1} parent=1 // pred_check
      _
    $region35: #{tpu_custom_call.1} parent=1 // pred_check_branch
      %617 = sbr.rel (0) target = $region37
    $region36: #{tpu_custom_call.1} parent=1 // pred_region
      %618 = dma.done [#allocation4], 128
    $region37: #{tpu_custom_call.1} parent=1 // pred_fallthru
      _
    %619 = vsyncpa [#allocation3], 1
    %620 = vsyncpa [#allocation6], 1
    %621 = vsyncpa [#allocation4], 1

</llo_original>
